<compile_context>
chip_gen: v6e
topology: v6e:2x2x1
jax: 0.10.0
libtpu: 0.0.40
codegen_flags: <defaults>
</compile_context>

<pallas_src>
import jax
import jax.numpy as jnp
from jax.experimental import pallas as pl
from jax.experimental.pallas import tpu as pltpu

BN_EPS = 1e-5
LEAKY_SLOPE = 0.1


def _round_up(x, m):
    return (x + m - 1) // m * m


def _pad_cast(a, shape, dtype):
    """Zero-pad `a` up to `shape` and cast; no copy if already conforming."""
    if tuple(a.shape) == tuple(shape):
        return a if a.dtype == dtype else a.astype(dtype)
    out = jnp.zeros(shape, dtype)
    return out.at[tuple(slice(0, s) for s in a.shape)].set(a.astype(dtype))


def _vmem_capacity_bytes():
    try:
        return pltpu.get_tpu_info().vmem_capacity_bytes
    except Exception:
        return 64 << 20  # conservative (v7x-sized) fallback


def _make_kernel(out_needs_cast):
    def kernel(x_ref, w1_ref, g_ref, b_ref, w2_ref, b2_ref, o_ref, *scratch):
        # f32 accumulator: scratch when the output is narrow, else the output
        # block itself (it stays VMEM-resident across the reduction axis).
        acc_ref = scratch[0] if out_needs_cast else o_ref
        j = pl.program_id(1)  # bottleneck (reduction) axis

        @pl.when(j == 0)
        def _init():
            acc_ref[...] = jnp.broadcast_to(
                b2_ref[...].astype(jnp.float32), acc_ref.shape)

        # ---- Linear 1 for this bottleneck tile (bf16 in, f32 acc on MXU) ----
        h = jnp.dot(x_ref[...], w1_ref[...],
                    preferred_element_type=jnp.float32)

        # ---- BatchNorm1d, training-mode batch stats (one pass over h) ----
        inv_b = 1.0 / h.shape[0]
        s1 = jnp.sum(h, axis=0, keepdims=True)
        s2 = jnp.sum(h * h, axis=0, keepdims=True)
        mean = s1 * inv_b
        var = jnp.maximum(s2 * inv_b - mean * mean, 0.0)
        scale = g_ref[...] * jax.lax.rsqrt(var + BN_EPS)
        shift = b_ref[...] - mean * scale

        # ---- fused normalize + LeakyReLU(0.1) + bf16 cast ----
        y = h * scale + shift
        y = jnp.maximum(y, LEAKY_SLOPE * y)

        # ---- Linear 2: accumulate this tile's contribution ----
        acc_ref[...] += jnp.dot(y.astype(w2_ref.dtype), w2_ref[...],
                                preferred_element_type=jnp.float32)

        if out_needs_cast:
            @pl.when(j == pl.num_programs(1) - 1)
            def _finalize():
                o_ref[...] = acc_ref[...].astype(o_ref.dtype)

    return kernel


def prepare_params(w1, gamma, beta, w2, b2):
    """Pad + cast parameters ONCE (hoisted out of the per-call hot path).

    w1: (input_dim, num_bottleneck); w2: (num_bottleneck, class_num);
    gamma/beta: (num_bottleneck,) or (1, num_bottleneck); b2: (class_num,) or
    (1, class_num).  Returns a tuple consumed by class_block().
    """
    din, nb = w1.shape
    nb2, cnum = w2.shape
    assert nb == nb2
    din_p = _round_up(din, 16)    # bf16 sublane pack is enough (full-extent block)
    nb_p = _round_up(nb, 128)
    c_p = _round_up(cnum, 128)

    w1p = _pad_cast(w1, (din_p, nb_p), jnp.bfloat16)
    w2p = _pad_cast(w2, (nb_p, c_p), jnp.bfloat16)
    gp = _pad_cast(gamma.reshape(1, -1), (1, nb_p), jnp.float32)
    bp = _pad_cast(beta.reshape(1, -1), (1, nb_p), jnp.float32)
    b2p = _pad_cast(b2.reshape(1, -1), (1, c_p), jnp.float32)
    return (w1p, gp, bp, w2p, b2p, cnum)


def class_block(x, params, *, tile_nb=None, tile_c=None):
    """x: (B, input_dim); params from prepare_params().  Training-mode BN."""
    w1p, gp, bp, w2p, b2p, class_num = params
    B, din = x.shape
    din_p, nb_p = w1p.shape
    _, c_p = w2p.shape
    out_dtype = x.dtype
    out_itemsize = jnp.dtype(out_dtype).itemsize

    # x: only copy when padding is actually needed.
    xp = x.astype(jnp.bfloat16) if din == din_p \
        else _pad_cast(x, (B, din_p), jnp.bfloat16)

    big_vmem = _vmem_capacity_bytes() > (96 << 20)   # v5e/v6e: 128 MiB; v7x: 64 MiB

    # Bottleneck (reduction) tile: prefer >=2 grid steps so weight DMAs pipeline;
    # cap generation-aware (1024 on 128 MiB parts, 512 on v7x).
    if tile_nb is None:
        cap = 1024 if big_vmem else 512
        tile_nb = min(nb_p, cap)
        for cand in (1024, 512, 256, 128):
            if cand <= cap and nb_p % cand == 0 and nb_p // cand >= 2:
                tile_nb = cand
                break

    # Class (parallel) tile: keep >=256 wide for the 256x256 MXU, split into
    # >=2 tiles when possible so v7x's second TensorCore gets work.
    if tile_c is None:
        tile_c = min(c_p, 512)
        for cand in (512, 256):
            if c_p % cand == 0 and c_p // cand >= 2:
                tile_c = cand
                break

    c_tiles = c_p // tile_c
    n_tiles = nb_p // tile_nb

    out_needs_cast = jnp.dtype(out_dtype) != jnp.dtype(jnp.float32)
    kernel = _make_kernel(out_needs_cast)
    scratch_shapes = ([pltpu.VMEM((B, tile_c), jnp.float32)]
                      if out_needs_cast else [])

    # VMEM budget: actual tile footprint (double-buffered inputs/outputs)
    # with headroom, capped at 48 MiB (safe on v7x's 64 MiB physical VMEM).
    need = (2 * B * din_p * 2            # x (double-buffered bf16)
            + 2 * din_p * tile_nb * 2    # w1 tile
            + 2 * tile_nb * tile_c * 2   # w2 tile
            + 2 * 2 * tile_nb * 4        # gamma, beta
            + 2 * tile_c * 4             # b2
            + 2 * B * tile_c * out_itemsize   # output block
            + B * tile_c * 4             # acc scratch (worst case)
            + 2 * B * tile_nb * 4)       # h / y temporaries
    vmem_limit = min(max(2 * need, 32 << 20), 48 << 20)

    cost = pl.CostEstimate(
        flops=2 * B * din_p * nb_p * c_tiles + 2 * B * nb_p * c_p,
        transcendentals=nb_p * c_tiles,
        bytes_accessed=(xp.size * 2 + w1p.size * 2 * c_tiles + w2p.size * 2
                        + (gp.size + bp.size) * 4 * c_tiles + b2p.size * 4
                        + B * c_p * out_itemsize),
    )

    out_p = pl.pallas_call(
        kernel,
        out_shape=jax.ShapeDtypeStruct((B, c_p), out_dtype),
        grid=(c_tiles, n_tiles),
        in_specs=[
            pl.BlockSpec((B, din_p), lambda i, j: (0, 0)),        # x (resident)
            pl.BlockSpec((din_p, tile_nb), lambda i, j: (0, j)),  # w1 col tile
            pl.BlockSpec((1, tile_nb), lambda i, j: (0, j)),      # gamma
            pl.BlockSpec((1, tile_nb), lambda i, j: (0, j)),      # beta
            pl.BlockSpec((tile_nb, tile_c), lambda i, j: (j, i)), # w2 tile
            pl.BlockSpec((1, tile_c), lambda i, j: (0, i)),       # b2
        ],
        out_specs=pl.BlockSpec((B, tile_c), lambda i, j: (0, i)),
        scratch_shapes=scratch_shapes,
        compiler_params=pltpu.CompilerParams(
            dimension_semantics=("parallel", "arbitrary"),
            vmem_limit_bytes=int(vmem_limit),
        ),
        cost_estimate=cost,
    )(xp, w1p, gp, bp, w2p, b2p)

    return out_p[:, :class_num]


def init_params(key, input_dim, num_bottleneck, class_num):
    """Matches weights_init_kaiming / weights_init_classifier (b1 omitted:
    it is initialized to 0 and cancelled by training-mode BN anyway)."""
    k1, k2, k3 = jax.random.split(key, 3)
    # add_block Linear: kaiming_normal(a=0, mode='fan_out') -> std = sqrt(2/fan_out)
    std1 = (2.0 / num_bottleneck) ** 0.5
    w1 = std1 * jax.random.normal(k1, (input_dim, num_bottleneck), jnp.float32)
    # BatchNorm1d: weight ~ N(1.0, 0.02), bias = 0
    gamma = 1.0 + 0.02 * jax.random.normal(k2, (1, num_bottleneck), jnp.float32)
    beta = jnp.zeros((1, num_bottleneck), jnp.float32)
    # classifier Linear: weight ~ N(0, 0.001), bias = 0
    w2 = 0.001 * jax.random.normal(k3, (num_bottleneck, class_num), jnp.float32)
    b2 = jnp.zeros((1, class_num), jnp.float32)
    return w1, gamma, beta, w2, b2


if __name__ == "__main__":
    # Module defaults: num_bottleneck=512 (gives a 2-step pipelined reduction).
    B, INPUT_DIM, NUM_BOTTLENECK, CLASS_NUM = 8, 64, 512, 32

    key = jax.random.PRNGKey(0)
    kx, kp = jax.random.split(key)
    x = jax.random.normal(kx, (B, INPUT_DIM), jnp.float32)
    w1, gamma, beta, w2, b2 = init_params(kp, INPUT_DIM, NUM_BOTTLENECK, CLASS_NUM)

    params = prepare_params(w1, gamma, beta, w2, b2)   # pad/cast once (hoisted)
    out = class_block(x, params)
    out = jax.block_until_ready(out)

    # Pure-JAX reference with the same bf16-operand / f32-accumulate math.
    xb, w1b, w2b = (a.astype(jnp.bfloat16) for a in (x, w1, w2))
    h = jnp.dot(xb, w1b, preferred_element_type=jnp.float32)
    mean = jnp.mean(h, axis=0, keepdims=True)
    hc = h - mean
    var = jnp.mean(hc * hc, axis=0, keepdims=True)
    h = hc * (gamma * jax.lax.rsqrt(var + BN_EPS)) + beta
    h = jnp.where(h > 0, h, LEAKY_SLOPE * h)
    ref = (jnp.dot(h.astype(jnp.bfloat16), w2b,
                   preferred_element_type=jnp.float32) + b2).astype(x.dtype)

    assert out.shape == (B, CLASS_NUM)
    assert jnp.allclose(out, ref, atol=2e-3, rtol=2e-3), float(
        jnp.max(jnp.abs(out - ref)))

    print("KERNEL_OK")
</pallas_src>

<mosaic_0001>
module attributes {stable_mosaic.version = 11 : i64} {
  func.func @kernel(%arg0: i32, %arg1: i32, %arg2: memref<8x64xbf16, #tpu.memory_space<vmem>>, %arg3: memref<64x256xbf16, #tpu.memory_space<vmem>>, %arg4: memref<1x256xf32, #tpu.memory_space<vmem>>, %arg5: memref<1x256xf32, #tpu.memory_space<vmem>>, %arg6: memref<256x128xbf16, #tpu.memory_space<vmem>>, %arg7: memref<1x128xf32, #tpu.memory_space<vmem>>, %arg8: memref<8x128xf32, #tpu.memory_space<vmem>>) attributes {dimension_semantics = [#tpu.dimension_semantics<parallel>, #tpu.dimension_semantics<arbitrary>], iteration_bounds = array<i64: 1, 2>, scalar_prefetch = 0 : i64, scratch_operands = 0 : i64, tpu.core_type = #tpu.core_type<tc>, window_params = [{pipeline_mode = #tpu.pipeline_mode<synchronous>, transform_indices = @transform_0, window_bounds = array<i64: 8, 64>}, {transform_indices = @transform_1, window_bounds = array<i64: 64, 256>}, {transform_indices = @transform_2, window_bounds = array<i64: 1, 256>}, {transform_indices = @transform_3, window_bounds = array<i64: 1, 256>}, {transform_indices = @transform_4, window_bounds = array<i64: 256, 128>}, {transform_indices = @transform_5, window_bounds = array<i64: 1, 128>}, {transform_indices = @transform_6, window_bounds = array<i64: 8, 128>}]} {
    %c0_i32 = arith.constant 0 : i32
    %0 = arith.cmpi eq, %arg1, %c0_i32 : i32
    %1 = arith.extui %0 : i1 to i32
    %c0_i32_0 = arith.constant 0 : i32
    %2 = arith.cmpi ne, %1, %c0_i32_0 : i32
    scf.if %2 {
      %c0_22 = arith.constant 0 : index
      %c0_23 = arith.constant 0 : index
      %40 = vector.load %arg7[%c0_22, %c0_23] : memref<1x128xf32, #tpu.memory_space<vmem>>, vector<1x128xf32>
      %41 = vector.shape_cast %40 : vector<1x128xf32> to vector<1x128xf32>
      %42 = vector.broadcast %41 : vector<1x128xf32> to vector<8x128xf32>
      %c0_24 = arith.constant 0 : index
      %c0_25 = arith.constant 0 : index
      %43 = vector.load %arg8[%c0_24, %c0_25] : memref<8x128xf32, #tpu.memory_space<vmem>>, vector<8x128xf32>
      tpu.vector_store %arg8[%c0_24, %c0_25], %42 {strides = array<i32>} : memref<8x128xf32, #tpu.memory_space<vmem>>, vector<8x128xf32>,
    } else {
    }
    %c0 = arith.constant 0 : index
    %c0_1 = arith.constant 0 : index
    %3 = vector.load %arg2[%c0, %c0_1] : memref<8x64xbf16, #tpu.memory_space<vmem>>, vector<8x64xbf16>
    %c0_2 = arith.constant 0 : index
    %c0_3 = arith.constant 0 : index
    %4 = vector.load %arg3[%c0_2, %c0_3] : memref<64x256xbf16, #tpu.memory_space<vmem>>, vector<64x256xbf16>
    %cst = arith.constant dense<0.000000e+00> : vector<8x256xf32>
    %5 = tpu.matmul %3, %4, %cst {dimension_numbers = #tpu.dot_dimension_numbers<[1], [0], [0], [1], [0, 0, 1, 1], [], []>} : vector<8x64xbf16>, vector<64x256xbf16>, vector<8x256xf32> -> vector<8x256xf32>
    %cst_4 = arith.constant dense<0.000000e+00> : vector<256xf32>
    %6 = vector.multi_reduction <add>, %5, %cst_4 [0] : vector<8x256xf32> to vector<256xf32>
    %7 = vector.shape_cast %6 : vector<256xf32> to vector<1x256xf32>
    %8 = arith.mulf %5, %5 : vector<8x256xf32>
    %cst_5 = arith.constant dense<0.000000e+00> : vector<256xf32>
    %9 = vector.multi_reduction <add>, %8, %cst_5 [0] : vector<8x256xf32> to vector<256xf32>
    %10 = vector.shape_cast %9 : vector<256xf32> to vector<1x256xf32>
    %cst_6 = arith.constant 1.250000e-01 : f32
    %11 = vector.broadcast %cst_6 : f32 to vector<1x256xf32>
    %12 = arith.mulf %7, %11 : vector<1x256xf32>
    %cst_7 = arith.constant 1.250000e-01 : f32
    %13 = vector.broadcast %cst_7 : f32 to vector<1x256xf32>
    %14 = arith.mulf %10, %13 : vector<1x256xf32>
    %15 = arith.mulf %12, %12 : vector<1x256xf32>
    %16 = arith.subf %14, %15 : vector<1x256xf32>
    %cst_8 = arith.constant 0.000000e+00 : f32
    %17 = vector.broadcast %cst_8 : f32 to vector<1x256xf32>
    %18 = arith.maximumf %16, %17 : vector<1x256xf32>
    %c0_9 = arith.constant 0 : index
    %c0_10 = arith.constant 0 : index
    %19 = vector.load %arg4[%c0_9, %c0_10] : memref<1x256xf32, #tpu.memory_space<vmem>>, vector<1x256xf32>
    %cst_11 = arith.constant 9.99999974E-6 : f32
    %20 = vector.broadcast %cst_11 : f32 to vector<1x256xf32>
    %21 = arith.addf %18, %20 : vector<1x256xf32>
    %22 = math.rsqrt %21 : vector<1x256xf32>
    %23 = arith.mulf %19, %22 : vector<1x256xf32>
    %c0_12 = arith.constant 0 : index
    %c0_13 = arith.constant 0 : index
    %24 = vector.load %arg5[%c0_12, %c0_13] : memref<1x256xf32, #tpu.memory_space<vmem>>, vector<1x256xf32>
    %25 = arith.mulf %12, %23 : vector<1x256xf32>
    %26 = arith.subf %24, %25 : vector<1x256xf32>
    %27 = vector.broadcast %23 : vector<1x256xf32> to vector<8x256xf32>
    %28 = arith.mulf %5, %27 : vector<8x256xf32>
    %29 = vector.broadcast %26 : vector<1x256xf32> to vector<8x256xf32>
    %30 = arith.addf %28, %29 : vector<8x256xf32>
    %cst_14 = arith.constant 1.000000e-01 : f32
    %31 = vector.broadcast %cst_14 : f32 to vector<8x256xf32>
    %32 = arith.mulf %31, %30 : vector<8x256xf32>
    %33 = arith.maximumf %30, %32 : vector<8x256xf32>
    %c0_15 = arith.constant 0 : index
    %c0_16 = arith.constant 0 : index
    %34 = vector.load %arg8[%c0_15, %c0_16] : memref<8x128xf32, #tpu.memory_space<vmem>>, vector<8x128xf32>
    %35 = arith.truncf %33 : vector<8x256xf32> to vector<8x256xbf16>
    %c0_17 = arith.constant 0 : index
    %c0_18 = arith.constant 0 : index
    %36 = vector.load %arg6[%c0_17, %c0_18] : memref<256x128xbf16, #tpu.memory_space<vmem>>, vector<256x128xbf16>
    %cst_19 = arith.constant dense<0.000000e+00> : vector<8x128xf32>
    %37 = tpu.matmul %35, %36, %cst_19 {dimension_numbers = #tpu.dot_dimension_numbers<[1], [0], [0], [1], [0, 0, 1, 1], [], []>} : vector<8x256xbf16>, vector<256x128xbf16>, vector<8x128xf32> -> vector<8x128xf32>
    %38 = arith.addf %34, %37 : vector<8x128xf32>
    %c0_20 = arith.constant 0 : index
    %c0_21 = arith.constant 0 : index
    %39 = vector.load %arg8[%c0_20, %c0_21] : memref<8x128xf32, #tpu.memory_space<vmem>>, vector<8x128xf32>
    tpu.vector_store %arg8[%c0_20, %c0_21], %38 {strides = array<i32>} : memref<8x128xf32, #tpu.memory_space<vmem>>, vector<8x128xf32>,
    return
  }
  func.func @transform_0(%arg0: i32, %arg1: i32) -> (i32, i32) {
    %c0_i32 = arith.constant 0 : i32
    %c0_i32_0 = arith.constant 0 : i32
    %c0_i32_1 = arith.constant 0 : i32
    return %c0_i32, %c0_i32_0 : i32, i32
  }
  func.func @transform_1(%arg0: i32, %arg1: i32) -> (i32, i32) {
    %c0_i32 = arith.constant 0 : i32
    %c0_i32_0 = arith.constant 0 : i32
    return %c0_i32, %arg1 : i32, i32
  }
  func.func @transform_2(%arg0: i32, %arg1: i32) -> (i32, i32) {
    %c0_i32 = arith.constant 0 : i32
    %c0_i32_0 = arith.constant 0 : i32
    return %c0_i32, %arg1 : i32, i32
  }
  func.func @transform_3(%arg0: i32, %arg1: i32) -> (i32, i32) {
    %c0_i32 = arith.constant 0 : i32
    %c0_i32_0 = arith.constant 0 : i32
    return %c0_i32, %arg1 : i32, i32
  }
  func.func @transform_4(%arg0: i32, %arg1: i32) -> (i32, i32) {
    %c0_i32 = arith.constant 0 : i32
    return %arg1, %arg0 : i32, i32
  }
  func.func @transform_5(%arg0: i32, %arg1: i32) -> (i32, i32) {
    %c0_i32 = arith.constant 0 : i32
    %c0_i32_0 = arith.constant 0 : i32
    return %c0_i32, %arg0 : i32, i32
  }
  func.func @transform_6(%arg0: i32, %arg1: i32) -> (i32, i32) {
    %c0_i32 = arith.constant 0 : i32
    %c0_i32_0 = arith.constant 0 : i32
    return %c0_i32, %arg0 : i32, i32
  }
}

</mosaic_0001>

<llo_original>
// kernel: tpu_custom_call.1
$region0: #{tpu_custom_call.1}
  #allocation0 [shape = 'u32[]', space=smem, size = 0x4, offset = 0x4, fixed_abs, tag = 'smem constant byte address 0x4 - core index']
  #allocation1 [shape = 'u32[144,128]{1,0:T(1,128)}', space=vmem, size = 0x12000, scoped, tag = 'internal scratch']
  %s0 = inlined_call_operand.hbm [shape: bf16[8,64], index: 0, kind: input, shape index: {}]
  %s1 = inlined_call_operand.hbm [shape: bf16[64,512], index: 1, kind: input, shape index: {}]
  %s2 = inlined_call_operand.hbm [shape: f32[1,512], index: 2, kind: input, shape index: {}]
  %s3 = inlined_call_operand.vmem [shape: f32[1,512], index: 3, kind: input, shape index: {}]
  %s4 = inlined_call_operand.hbm [shape: bf16[512,128], index: 4, kind: input, shape index: {}]
  %s5 = inlined_call_operand.vmem [shape: f32[1,128], index: 5, kind: input, shape index: {}]
  %s6 = inlined_call_operand.hbm [shape: f32[8,128], index: 6, kind: output, shape index: {}]
  %s7 = sld [smem:[#allocation0]]
  $region77: #{tpu_custom_call.1} parent=0
    _
  %s9 = ssub.s32 1, %s7
  %s10 = scalar_select 0, %s9, %s7
  $region1: #{tpu_custom_call.1} parent=0
    #allocation2 [shape = 'u8[2048]{0}', space=vmem, size = 0x800, scoped, tag = 'input window, operand 0, single buffered']
    #allocation3 [shape = 's32[2]{0}', space=sflag, size = 0x8, scoped, tag = 'scoped memory for tpu_custom_call.1']
    #allocation4 [shape = 's32[2]{0}', space=sflag, size = 0x8, scoped, tag = 'scoped memory for tpu_custom_call.1']
    #allocation5 [shape = 'u8[65536]{0}', space=vmem, size = 0x10000, scoped, tag = 'input window, operand 1']
    #allocation6 [shape = 's32[2]{0}', space=sflag, size = 0x8, scoped, tag = 'scoped memory for tpu_custom_call.1']
    #allocation7 [shape = 'u8[2048]{0}', space=vmem, size = 0x800, scoped, tag = 'input window, operand 2']
    #allocation8 [shape = 'u8[131072]{0}', space=vmem, size = 0x20000, scoped, tag = 'input window, operand 4']
    #allocation9 [shape = 's32[2]{0}', space=sflag, size = 0x8, scoped, tag = 'scoped memory for tpu_custom_call.1']
    #allocation10 [shape = 'u8[4096]{0}', space=vmem, size = 0x1000, scoped, tag = 'output window, operand 0, single buffered']
    %11 = vsyncpa [#allocation3], 0
    %12 = vsyncpa [#allocation6], 0
    %s13 = scalar_lea.sflag [#allocation6], 1
    %14 = vsyncpa %s13, 0
    %15 = vsyncpa [#allocation9], 0
    %s16 = scalar_lea.sflag [#allocation9], 1
    %17 = vsyncpa %s16, 0
    %18 = vsyncpa [#allocation4], 0
    loop: start=0, step=1, limit=4
    $region2: #{tpu_custom_call.1} parent=1 // loop_pre_header
      _
    $region3: #{tpu_custom_call.1} parent=1 // loop_header
      %s20 = sphi 0, %s24
      %p21 = scmp.ge.s32.totalorder %s20, 4
      %s27 = sphi 0, %s39
      %s28 = sphi 0, %s35
      %s29 = sphi 0, %s27
      %s30 = sphi 0, %s28
      %s31 = sphi 0, %s29
      %s32 = sphi 0, %s30
      %s40 = sphi 0, %s40
      %s42 = sphi 0, %s40
      %s43 = sphi 0, %s42
      %s57 = sphi 0, %s43
      %s63 = sphi 0, %s65
      %s66 = sphi 0, %s63
      %s67 = sphi 0, %s66
      %s83 = sphi 0, %s67
      %s89 = sphi 0, %s91
      %s92 = sphi 0, %s89
      %s93 = sphi 0, %s92
      %s109 = sphi 0, %s93
      %s115 = sphi 0, %s117
      %s118 = sphi 0, %s115
      %s119 = sphi 0, %s118
      %s135 = sphi 0, %s119
      %s143 = sphi 0, %s145
      %s146 = sphi 0, %s143
      %s147 = sphi 0, %s146
      %s163 = sphi 0, %s147
      %s169 = sphi 0, %s171
      %s172 = sphi 0, %s169
      %s173 = sphi 0, %s172
      %s189 = sphi 0, %s173
      %s195 = sphi 0, %s197
      %s198 = sphi 0, %s195
      %s199 = sphi 0, %s198
      %s215 = sphi 0, %s199
    $region4: #{tpu_custom_call.1} parent=1 // loop_header_branch
      %23 = sbr.rel (%p21) target = $region8
    $region5: #{tpu_custom_call.1} parent=1 // loop_body
      %s25 = ssub.s32 %s20, 1
      %s26 = ssub.s32 %s20, 2
      %s33 = sadd.s32 1, %s28
      %p34 = scmp.ge.s32.totalorder %s33, 2
      %s35 = scalar_select %p34, 0, %s33
      %s36 = sadd.s32 1, %s27
      %s37 = scalar_select %p34, %s36, %s27
      %p38 = scmp.ge.s32.totalorder %s37, 1
      %s39 = scalar_select %p38, 0, %s37
      %s41 = sadd.s32 %s40, 1
      %p44 = scmp.eq.s32.totalorder %s20, 1
      %p45 = scmp.ne.s32.totalorder %s40, %s42
      %p46 = scmp.eq.s32.totalorder %s20, 0
      %p47 = por %p45, %p46
      %p48 = scmp.ne.s32.totalorder %s40, %s42
      %p49 = scmp.eq.s32.totalorder %s25, 1
      %p50 = por %p48, %p49
      %p51 = scmp.ne.s32.totalorder %s42, %s43
      %p52 = scmp.eq.s32.totalorder %s25, 0
      %p53 = por %p51, %p52
      %p54 = scmp.ne.s32.totalorder %s42, %s43
      %p55 = scmp.eq.s32.totalorder %s26, 1
      %p56 = por %p54, %p55
      %p58 = scmp.ne.s32.totalorder %s43, %s57
      %p59 = scmp.eq.s32.totalorder %s26, 0
      %p60 = por %p58, %p59
      %s61 = ssub.s32 %s28, %s35
      %p62 = scmp.eq.s32.totalorder %s61, 0
      %s64 = sadd.s32 %s63, 1
      %s65 = scalar_select %p62, %s63, %s64
      %p68 = pneg %p62
      %p69 = scmp.eq.s32.totalorder %s20, 1
      %p70 = por %p68, %p69
      %p71 = scmp.ne.s32.totalorder %s63, %s66
      %p72 = scmp.eq.s32.totalorder %s20, 0
      %p73 = por %p71, %p72
      %p74 = scmp.ne.s32.totalorder %s63, %s66
      %p75 = scmp.eq.s32.totalorder %s25, 1
      %p76 = por %p74, %p75
      %p77 = scmp.ne.s32.totalorder %s66, %s67
      %p78 = scmp.eq.s32.totalorder %s25, 0
      %p79 = por %p77, %p78
      %p80 = scmp.ne.s32.totalorder %s66, %s67
      %p81 = scmp.eq.s32.totalorder %s26, 1
      %p82 = por %p80, %p81
      %p84 = scmp.ne.s32.totalorder %s67, %s83
      %p85 = scmp.eq.s32.totalorder %s26, 0
      %p86 = por %p84, %p85
      %s87 = ssub.s32 %s28, %s35
      %p88 = scmp.eq.s32.totalorder %s87, 0
      %s90 = sadd.s32 %s89, 1
      %s91 = scalar_select %p88, %s89, %s90
      %p94 = pneg %p88
      %p95 = scmp.eq.s32.totalorder %s20, 1
      %p96 = por %p94, %p95
      %p97 = scmp.ne.s32.totalorder %s89, %s92
      %p98 = scmp.eq.s32.totalorder %s20, 0
      %p99 = por %p97, %p98
      %p100 = scmp.ne.s32.totalorder %s89, %s92
      %p101 = scmp.eq.s32.totalorder %s25, 1
      %p102 = por %p100, %p101
      %p103 = scmp.ne.s32.totalorder %s92, %s93
      %p104 = scmp.eq.s32.totalorder %s25, 0
      %p105 = por %p103, %p104
      %p106 = scmp.ne.s32.totalorder %s92, %s93
      %p107 = scmp.eq.s32.totalorder %s26, 1
      %p108 = por %p106, %p107
      %p110 = scmp.ne.s32.totalorder %s93, %s109
      %p111 = scmp.eq.s32.totalorder %s26, 0
      %p112 = por %p110, %p111
      %s113 = ssub.s32 %s28, %s35
      %p114 = scmp.eq.s32.totalorder %s113, 0
      %s116 = sadd.s32 %s115, 1
      %s117 = scalar_select %p114, %s115, %s116
      %p120 = pneg %p114
      %p121 = scmp.eq.s32.totalorder %s20, 1
      %p122 = por %p120, %p121
      %p123 = scmp.ne.s32.totalorder %s115, %s118
      %p124 = scmp.eq.s32.totalorder %s20, 0
      %p125 = por %p123, %p124
      %p126 = scmp.ne.s32.totalorder %s115, %s118
      %p127 = scmp.eq.s32.totalorder %s25, 1
      %p128 = por %p126, %p127
      %p129 = scmp.ne.s32.totalorder %s118, %s119
      %p130 = scmp.eq.s32.totalorder %s25, 0
      %p131 = por %p129, %p130
      %p132 = scmp.ne.s32.totalorder %s118, %s119
      %p133 = scmp.eq.s32.totalorder %s26, 1
      %p134 = por %p132, %p133
      %p136 = scmp.ne.s32.totalorder %s119, %s135
      %p137 = scmp.eq.s32.totalorder %s26, 0
      %p138 = por %p136, %p137
      %s139 = ssub.s32 %s28, %s35
      %s140 = ssub.s32 %s27, %s39
      %s141 = sor.u32 %s139, %s140
      %p142 = scmp.eq.s32.totalorder %s141, 0
      %s144 = sadd.s32 %s143, 1
      %s145 = scalar_select %p142, %s143, %s144
      %p148 = pneg %p142
      %p149 = scmp.eq.s32.totalorder %s20, 1
      %p150 = por %p148, %p149
      %p151 = scmp.ne.s32.totalorder %s143, %s146
      %p152 = scmp.eq.s32.totalorder %s20, 0
      %p153 = por %p151, %p152
      %p154 = scmp.ne.s32.totalorder %s143, %s146
      %p155 = scmp.eq.s32.totalorder %s25, 1
      %p156 = por %p154, %p155
      %p157 = scmp.ne.s32.totalorder %s146, %s147
      %p158 = scmp.eq.s32.totalorder %s25, 0
      %p159 = por %p157, %p158
      %p160 = scmp.ne.s32.totalorder %s146, %s147
      %p161 = scmp.eq.s32.totalorder %s26, 1
      %p162 = por %p160, %p161
      %p164 = scmp.ne.s32.totalorder %s147, %s163
      %p165 = scmp.eq.s32.totalorder %s26, 0
      %p166 = por %p164, %p165
      %s167 = ssub.s32 %s27, %s39
      %p168 = scmp.eq.s32.totalorder %s167, 0
      %s170 = sadd.s32 %s169, 1
      %s171 = scalar_select %p168, %s169, %s170
      %p174 = pneg %p168
      %p175 = scmp.eq.s32.totalorder %s20, 1
      %p176 = por %p174, %p175
      %p177 = scmp.ne.s32.totalorder %s169, %s172
      %p178 = scmp.eq.s32.totalorder %s20, 0
      %p179 = por %p177, %p178
      %p180 = scmp.ne.s32.totalorder %s169, %s172
      %p181 = scmp.eq.s32.totalorder %s25, 1
      %p182 = por %p180, %p181
      %p183 = scmp.ne.s32.totalorder %s172, %s173
      %p184 = scmp.eq.s32.totalorder %s25, 0
      %p185 = por %p183, %p184
      %p186 = scmp.ne.s32.totalorder %s172, %s173
      %p187 = scmp.eq.s32.totalorder %s26, 1
      %p188 = por %p186, %p187
      %p190 = scmp.ne.s32.totalorder %s173, %s189
      %p191 = scmp.eq.s32.totalorder %s26, 0
      %p192 = por %p190, %p191
      %s193 = ssub.s32 %s27, %s39
      %p194 = scmp.eq.s32.totalorder %s193, 0
      %s196 = sadd.s32 %s195, 1
      %s197 = scalar_select %p194, %s195, %s196
      %p200 = pneg %p194
      %p201 = scmp.eq.s32.totalorder %s20, 1
      %p202 = por %p200, %p201
      %p203 = scmp.ne.s32.totalorder %s195, %s198
      %p204 = scmp.eq.s32.totalorder %s20, 0
      %p205 = por %p203, %p204
      %p206 = scmp.ne.s32.totalorder %s195, %s198
      %p207 = scmp.eq.s32.totalorder %s25, 1
      %p208 = por %p206, %p207
      %p209 = scmp.ne.s32.totalorder %s198, %s199
      %p210 = scmp.eq.s32.totalorder %s25, 0
      %p211 = por %p209, %p210
      %p212 = scmp.ne.s32.totalorder %s198, %s199
      %p213 = scmp.eq.s32.totalorder %s26, 1
      %p214 = por %p212, %p213
      %p216 = scmp.ne.s32.totalorder %s199, %s215
      %p217 = scmp.eq.s32.totalorder %s26, 0
      %p218 = por %p216, %p217
      %p219 = scmp.le.s32.totalorder 1, %s20
      %p220 = scmp.lt.s32.totalorder %s20, 3
      %p221 = pnand %p219, %p220
      %p222 = pneg %p221
      // Predicated region
      $region9: #{tpu_custom_call.1} parent=5 // pred_check
        _
      $region10: #{tpu_custom_call.1} parent=5 // pred_check_branch
        %224 = sbr.rel (%p221) target = $region12
      $region11: #{tpu_custom_call.1} parent=5 // pred_region
        %s225 = ssub.s32 %s20, 1
        // Predicated region
        $region13: #{tpu_custom_call.1} parent=11 // pred_check
          %p226 = pneg %p53
        $region14: #{tpu_custom_call.1} parent=11 // pred_check_branch
          %228 = sbr.rel (%p226) target = $region16
        $region15: #{tpu_custom_call.1} parent=11 // pred_region
          %s230 = ssub.s32 64, 64
          %231 = vsyncadd [#allocation3], %s230
          %s233 = sshll.u32 [#allocation2], 4
          %s234 = int_to_ptr.vmem [resolvable:$true] %s233
          %236 = dma.hbm_to_vmem [thread:$0]  %s0, 64, %s234, [#allocation3]
        $region16: #{tpu_custom_call.1} parent=11 // pred_fallthru
          _
        // Predicated region
        $region17: #{tpu_custom_call.1} parent=11 // pred_check
          %p237 = pneg %p185
        $region18: #{tpu_custom_call.1} parent=11 // pred_check_branch
          %239 = sbr.rel (%p237) target = $region20
        $region19: #{tpu_custom_call.1} parent=11 // pred_region
          %p240 = scmp.lt.s32.totalorder %s29, 0
          %s241 = scalar_select %p240, %s29, 0
          %s242 = scalar_lea.vmem %s5, %s241
        $region20: #{tpu_custom_call.1} parent=11 // pred_fallthru
          _
      $region12: #{tpu_custom_call.1} parent=5 // pred_fallthru
        _
      %p243 = scmp.lt.s32.totalorder %s20, 2
      // Predicated region
      $region21: #{tpu_custom_call.1} parent=5 // pred_check
        %p244 = pneg %p243
      $region22: #{tpu_custom_call.1} parent=5 // pred_check_branch
        %246 = sbr.rel (%p244) target = $region24
      $region23: #{tpu_custom_call.1} parent=5 // pred_region
        // Predicated region
        $region25: #{tpu_custom_call.1} parent=23 // pred_check
          %p247 = pneg %p73
        $region26: #{tpu_custom_call.1} parent=23 // pred_check_branch
          %249 = sbr.rel (%p247) target = $region28
        $region27: #{tpu_custom_call.1} parent=23 // pred_region
          %s250 = sand.u32 %s20, 1
          %s251 = scalar_lea.sflag [#allocation6], %s250
          %s252 = sand.u32 %s63, 1
          %s253 = smul.addr %s252, 64
          %s254 = scalar_lea.vmem [#allocation5], %s253
          %s255 = smul.u32 2, %s28
          %s257 = ssub.s32 1024, 1024
          %258 = vsyncadd %s251, %s257
          %s259 = smul.addr %s255, 64
          %s260 = scalar_lea.hbm %s1, %s259
          %s261 = sshll.u32 %s254, 4
          %s262 = int_to_ptr.vmem [resolvable:$true] %s261
          %267 = dma.hbm_to_vmem [thread:$0]  %s260, 1024, %s262, %s251, 256, 128, 8
        $region28: #{tpu_custom_call.1} parent=23 // pred_fallthru
          _
        // Predicated region
        $region29: #{tpu_custom_call.1} parent=23 // pred_check
          %p268 = pneg %p99
        $region30: #{tpu_custom_call.1} parent=23 // pred_check_branch
          %270 = sbr.rel (%p268) target = $region32
        $region31: #{tpu_custom_call.1} parent=23 // pred_region
          %s271 = sand.u32 %s20, 1
          %s272 = scalar_lea.sflag [#allocation6], %s271
          %s273 = sand.u32 %s89, 1
          %s274 = smul.addr %s273, 2
          %s275 = scalar_lea.vmem [#allocation7], %s274
          %s276 = smul.u32 2, %s28
          %s278 = ssub.s32 32, 32
          %279 = vsyncadd %s272, %s278
          %s280 = smul.addr %s276, 16
          %s281 = scalar_lea.hbm %s2, %s280
          %s283 = sshll.u32 %s275, 4
          %s284 = int_to_ptr.vmem [resolvable:$true] %s283
          %286 = dma.hbm_to_vmem [thread:$0]  %s281, 32, %s284, %s272
        $region32: #{tpu_custom_call.1} parent=23 // pred_fallthru
          _
        // Predicated region
        $region33: #{tpu_custom_call.1} parent=23 // pred_check
          %p287 = pneg %p125
        $region34: #{tpu_custom_call.1} parent=23 // pred_check_branch
          %289 = sbr.rel (%p287) target = $region36
        $region35: #{tpu_custom_call.1} parent=23 // pred_region
          %s290 = smul.u32 2, %s28
          %p291 = scmp.lt.s32.totalorder %s290, 3
          %s292 = scalar_select %p291, %s290, 3
          %s293 = scalar_lea.vmem %s3, %s292
          %s294 = smul.u32 2, %s28
        $region36: #{tpu_custom_call.1} parent=23 // pred_fallthru
          _
        // Predicated region
        $region37: #{tpu_custom_call.1} parent=23 // pred_check
          %p295 = pneg %p153
        $region38: #{tpu_custom_call.1} parent=23 // pred_check_branch
          %297 = sbr.rel (%p295) target = $region40
        $region39: #{tpu_custom_call.1} parent=23 // pred_region
          %s298 = sand.u32 %s143, 1
          %s299 = scalar_lea.sflag [#allocation9], %s298
          %s300 = sand.u32 %s143, 1
          %s301 = smul.addr %s300, 128
          %s302 = scalar_lea.vmem [#allocation8], %s301
          %s303 = smul.u32 32, %s28
          %s305 = ssub.s32 2048, 2048
          %306 = vsyncadd %s299, %s305
          %s307 = sadd.s32 %s27, %s303
          %s308 = smul.addr %s307, 64
          %s309 = scalar_lea.hbm %s4, %s308
          %s310 = sshll.u32 %s302, 4
          %s311 = int_to_ptr.vmem [resolvable:$true] %s310
          %316 = dma.hbm_to_vmem [thread:$0]  %s309, 2048, %s311, %s299, 64, 64, 4
        $region40: #{tpu_custom_call.1} parent=23 // pred_fallthru
          _
      $region24: #{tpu_custom_call.1} parent=5 // pred_fallthru
        _
      %p317 = scmp.le.s32.totalorder 1, %s20
      %p318 = scmp.lt.s32.totalorder %s20, 3
      %p319 = pnand %p317, %p318
      %p320 = pneg %p319
      // Predicated region
      $region41: #{tpu_custom_call.1} parent=5 // pred_check
        _
      $region42: #{tpu_custom_call.1} parent=5 // pred_check_branch
        %322 = sbr.rel (%p319) target = $region44
      $region43: #{tpu_custom_call.1} parent=5 // pred_region
        %s323 = ssub.s32 %s20, 1
        // Predicated region
        $region45: #{tpu_custom_call.1} parent=43 // pred_check
          %p324 = pneg %p53
        $region46: #{tpu_custom_call.1} parent=43 // pred_check_branch
          %326 = sbr.rel (%p324) target = $region48
        $region47: #{tpu_custom_call.1} parent=43 // pred_region
          %327 = dma.done [#allocation3], 64
        $region48: #{tpu_custom_call.1} parent=43 // pred_fallthru
          _
        %s328 = sand.u32 %s25, 1
        %s329 = scalar_lea.sflag [#allocation6], %s328
        %s330 = sand.u32 %s66, 1
        %s331 = smul.addr %s330, 64
        %s332 = scalar_lea.vmem [#allocation5], %s331
        // Predicated region
        $region49: #{tpu_custom_call.1} parent=43 // pred_check
          %p333 = pneg %p79
        $region50: #{tpu_custom_call.1} parent=43 // pred_check_branch
          %335 = sbr.rel (%p333) target = $region52
        $region51: #{tpu_custom_call.1} parent=43 // pred_region
          %336 = dma.done %s329, 1024
        $region52: #{tpu_custom_call.1} parent=43 // pred_fallthru
          _
        %s337 = sand.u32 %s25, 1
        %s338 = scalar_lea.sflag [#allocation6], %s337
        %s339 = sand.u32 %s92, 1
        %s340 = smul.addr %s339, 2
        %s341 = scalar_lea.vmem [#allocation7], %s340
        // Predicated region
        $region53: #{tpu_custom_call.1} parent=43 // pred_check
          %p342 = pneg %p105
        $region54: #{tpu_custom_call.1} parent=43 // pred_check_branch
          %344 = sbr.rel (%p342) target = $region56
        $region55: #{tpu_custom_call.1} parent=43 // pred_region
          %345 = dma.done %s338, 32
        $region56: #{tpu_custom_call.1} parent=43 // pred_fallthru
          _
        %s346 = sand.u32 %s146, 1
        %s347 = scalar_lea.sflag [#allocation9], %s346
        %s348 = sand.u32 %s146, 1
        %s349 = smul.addr %s348, 128
        %s350 = scalar_lea.vmem [#allocation8], %s349
        // Predicated region
        $region57: #{tpu_custom_call.1} parent=43 // pred_check
          %p351 = pneg %p159
        $region58: #{tpu_custom_call.1} parent=43 // pred_check_branch
          %353 = sbr.rel (%p351) target = $region60
        $region59: #{tpu_custom_call.1} parent=43 // pred_region
          %354 = dma.done %s347, 2048
        $region60: #{tpu_custom_call.1} parent=43 // pred_fallthru
          _
        %p355 = pneg %p53
        %p356 = pneg %p50
        %s357 = sand.u32 %s25, 1
        %s358 = scalar_lea.sflag [#allocation6], %s357
        %s359 = sand.u32 %s66, 1
        %s360 = smul.addr %s359, 64
        %s361 = scalar_lea.vmem [#allocation5], %s360
        %p362 = pneg %p79
        %p363 = pneg %p76
        %s364 = sand.u32 %s25, 1
        %s365 = scalar_lea.sflag [#allocation6], %s364
        %s366 = sand.u32 %s92, 1
        %s367 = smul.addr %s366, 2
        %s368 = scalar_lea.vmem [#allocation7], %s367
        %p369 = pneg %p105
        %p370 = pneg %p102
        %s371 = smul.u32 2, %s30
        %p372 = scmp.lt.s32.totalorder %s371, 3
        %s373 = scalar_select %p372, %s371, 3
        %s374 = scalar_lea.vmem %s3, %s373
        %p375 = pneg %p131
        %p376 = pneg %p128
        %s377 = sand.u32 %s146, 1
        %s378 = scalar_lea.sflag [#allocation9], %s377
        %s379 = sand.u32 %s146, 1
        %s380 = smul.addr %s379, 128
        %s381 = scalar_lea.vmem [#allocation8], %s380
        %p382 = pneg %p159
        %p383 = pneg %p156
        %p384 = scmp.lt.s32.totalorder %s29, 0
        %s385 = scalar_select %p384, %s29, 0
        %s386 = scalar_lea.vmem %s5, %s385
        %p387 = pneg %p185
        %p388 = pneg %p182
        %p389 = pneg %p211
        %p390 = pneg %p208
        %s391 = smul.u32 2, %s30
        %s392 = smul.u32 2, %s30
        %s393 = smul.u32 2, %s30
        %p394 = scmp.lt.s32.totalorder %s393, 3
        %s395 = scalar_select %p394, %s393, 3
        %s396 = scalar_lea.vmem %s3, %s395
        %s397 = smul.u32 2, %s30
        %s398 = smul.u32 32, %s30
        %p399 = scmp.lt.s32.totalorder %s29, 0
        %s400 = scalar_select %p399, %s29, 0
        %s401 = scalar_lea.vmem %s5, %s400
        %p403 = scmp.eq.s32.totalorder %s30, 0
        // Predicated region
        $region61: #{tpu_custom_call.1} parent=43 // pred_check
          %p404 = pneg %p403
        $region62: #{tpu_custom_call.1} parent=43 // pred_check_branch
          %406 = sbr.rel (%p404) target = $region64
        $region63: #{tpu_custom_call.1} parent=43 // pred_region
          %v407 = vld [vmem:[%s401] sm:$0x1]
          %v409 = vlaneseq
          %v410 = vshrl.u32 %v409, 7
          %v411 = vsub.s32 0, %v410
          %v412 = vrot.slane %v407, %v411
          %414 = vst [vmem:[#allocation10] sm:$0xff] %v412
        $region64: #{tpu_custom_call.1} parent=43 // pred_fallthru
          _
        %v415 = vld [vmem:[#allocation2] sm:$0xf]
        %v416 = vld [vmem:[%s332] sm:$0xff]
        %v417 = vld [vmem:[%s332 + $0x8] sm:$0xff]
        %v418 = vld [vmem:[%s332 + $0x10] sm:$0xff]
        %v419 = vld [vmem:[%s332 + $0x18] sm:$0xff]
        %v420 = vld [vmem:[%s332 + $0x20] sm:$0xff]
        %v421 = vld [vmem:[%s332 + $0x28] sm:$0xff]
        %v422 = vld [vmem:[%s332 + $0x30] sm:$0xff]
        %v423 = vld [vmem:[%s332 + $0x38] sm:$0xff]
        %v432 = vunpack.c.l.b16 %v416
        %v433 = vunpack.c.h.b16 %v416
        %v434 = vunpack.c.l.b16 %v417
        %v435 = vunpack.c.h.b16 %v417
        %v436 = vunpack.c.l.b16 %v418
        %v437 = vunpack.c.h.b16 %v418
        %v438 = vunpack.c.l.b16 %v419
        %v439 = vunpack.c.h.b16 %v419
        %v440 = vunpack.c.l.b16 %v420
        %v441 = vunpack.c.h.b16 %v420
        %v442 = vunpack.c.l.b16 %v421
        %v443 = vunpack.c.h.b16 %v421
        %v444 = vunpack.c.l.b16 %v422
        %v445 = vunpack.c.h.b16 %v422
        %v446 = vunpack.c.l.b16 %v423
        %v447 = vunpack.c.h.b16 %v423
        %v448 = vpack.c.b16 %v434, %v432
        %v449 = vpack.c.b16 %v435, %v433
        %v450 = vpack.c.b16 %v438, %v436
        %v451 = vpack.c.b16 %v439, %v437
        %v452 = vpack.c.b16 %v442, %v440
        %v453 = vpack.c.b16 %v443, %v441
        %v454 = vpack.c.b16 %v446, %v444
        %v455 = vpack.c.b16 %v447, %v445
        %vm464 = vcmask 523264
        %v466 = vsel %vm464, %v415, 0
        %468 = vmatprep.subr.bf16.mxu0 0
        %469 = vmatpush1.bf16.msra.mxu0 0
        %470 = vmatprep.subr.bf16.mxu0 0
        %471 = vmatpush1.bf16.msra.mxu0 0
        %472 = vmatprep.subr.bf16.mxu0 0
        %473 = vmatpush1.bf16.msra.mxu0 0
        %474 = vmatprep.subr.bf16.mxu0 0
        %475 = vmatpush1.bf16.msra.mxu0 0
        %476 = vmatprep.subr.bf16.mxu0 %v455
        %477 = vmatpush1.bf16.msra.mxu0 %v454
        %478 = vmatprep.subr.bf16.mxu0 %v453
        %479 = vmatpush1.bf16.msra.mxu0 %v452
        %480 = vmatprep.subr.bf16.mxu0 %v451
        %481 = vmatpush1.bf16.msra.mxu0 %v450
        %482 = vmatprep.subr.bf16.mxu0 %v449
        %483 = vmatpush1.bf16.msra.mxu0 %v448
        %484 = vmatprep.subr.bf16.mxu0 0
        %485 = vmatpush2.bf16.msra.mxu0 0
        %486 = vmatprep.subr.bf16.mxu0 0
        %487 = vmatpush2.bf16.msra.mxu0 0
        %488 = vmatprep.subr.bf16.mxu0 0
        %489 = vmatpush2.bf16.msra.mxu0 0
        %490 = vmatprep.subr.bf16.mxu0 0
        %491 = vmatpush2.bf16.msra.mxu0 0
        %492 = vmatprep.subr.bf16.mxu0 0
        %493 = vmatpush2.bf16.msra.mxu0 0
        %494 = vmatprep.subr.bf16.mxu0 0
        %495 = vmatpush2.bf16.msra.mxu0 0
        %496 = vmatprep.subr.bf16.mxu0 0
        %497 = vmatpush2.bf16.msra.mxu0 0
        %498 = vmatprep.subr.bf16.mxu0 0
        %499 = vmatpush2.bf16.msra.mxu0 0
        %500 = vmatprep.mubr.bf16.mxu0 0
        %501 = vmatmul.mubr.bf16.gmra.mxu0 %v466
        %v502 = vpop.f32.mrf.mxu0
        %v503 = vadd.f32 0.0, %v502
        %v504 = vpop.f32.mrf.mxu0
        %v505 = vadd.f32 0.0, %v504
        %v506 = vpop.f32.mrf.mxu0
        %v507 = vpop.f32.mrf.mxu0
        %508 = vdwg.mxu0
        %v509 = vrot.slane %v503, 4
        %v510 = vadd.f32 %v503, %v509
        %v511 = vrot.slane %v510, 2
        %v512 = vadd.f32 %v510, %v511
        %v513 = vrot.slane %v512, 1
        %v514 = vadd.f32 %v512, %v513
        %v515 = vrot.slane %v505, 4
        %v516 = vadd.f32 %v505, %v515
        %v517 = vrot.slane %v516, 2
        %v518 = vadd.f32 %v516, %v517
        %v519 = vrot.slane %v518, 1
        %v520 = vadd.f32 %v518, %v519
        %v521 = vmul.f32 %v503, %v503
        %v522 = vmul.f32 %v505, %v505
        %v523 = vrot.slane %v521, 4
        %v524 = vadd.f32 %v521, %v523
        %v525 = vrot.slane %v524, 2
        %v526 = vadd.f32 %v524, %v525
        %v527 = vrot.slane %v526, 1
        %v528 = vadd.f32 %v526, %v527
        %v529 = vrot.slane %v522, 4
        %v530 = vadd.f32 %v522, %v529
        %v531 = vrot.slane %v530, 2
        %v532 = vadd.f32 %v530, %v531
        %v533 = vrot.slane %v532, 1
        %v534 = vadd.f32 %v532, %v533
        %v535 = vmul.f32 %v514, 0.125
        %v536 = vmul.f32 %v520, 0.125
        %v537 = vmul.f32 %v528, 0.125
        %v538 = vmul.f32 %v534, 0.125
        %v539 = vmul.f32 %v535, %v535
        %v540 = vmul.f32 %v536, %v536
        %v541 = vsub.f32 %v537, %v539
        %v542 = vsub.f32 %v538, %v540
        %v543 = vmax.f32 %v541, 0.0
        %v544 = vmax.f32 %v542, 0.0
        %v545 = vld [vmem:[%s341] sm:$0x3]
        %v546 = vadd.f32 %v543, 1e-05
        %v547 = vadd.f32 %v544, 1e-05
        %v548 = vrsqrt.pop %v546
        %v549 = vrsqrt.pop %v547
        %v552 = vcombine.low %v548, %v549
        %v554 = vunpack.c.l.s4 1966171168
        %v555 = vunpack.c.0.s8 %v554
        %v556 = vlaneseq
        %v557 = vshrl.u32 %v556, 7
        %v558 = vsub.s32 %v555, %v557
        %v559 = vrot.slane %v552, %v558
        %v561 = vunpack.c.l.s4 1966171168
        %v562 = vunpack.c.0.s8 %v561
        %v563 = vlaneseq
        %v564 = vshrl.u32 %v563, 7
        %v565 = vsub.s32 %v562, %v564
        %v566 = vrot.slane %v559, %v565
        %v568 = vmul.f32 %v545, %v566
        %v569 = vld [vmem:[%s396] sm:$0x3]
        %v571 = vlaneseq
        %v572 = vshrl.u32 %v571, 7
        %v573 = vsub.s32 0, %v572
        %v574 = vrot.slane %v568, %v573
        %v575 = vlaneseq
        %v576 = vshrl.u32 %v575, 7
        %v577 = vsub.s32 1, %v576
        %v578 = vrot.slane %v568, %v577
        %v581 = vmul.f32 %v535, %v574
        %v582 = vmul.f32 %v536, %v578
        %v585 = vcombine.low %v581, %v582
        %v587 = vunpack.c.l.s4 1966171168
        %v588 = vunpack.c.0.s8 %v587
        %v589 = vlaneseq
        %v590 = vshrl.u32 %v589, 7
        %v591 = vsub.s32 %v588, %v590
        %v592 = vrot.slane %v585, %v591
        %v594 = vunpack.c.l.s4 1966171168
        %v595 = vunpack.c.0.s8 %v594
        %v596 = vlaneseq
        %v597 = vshrl.u32 %v596, 7
        %v598 = vsub.s32 %v595, %v597
        %v599 = vrot.slane %v592, %v598
        %v601 = vsub.f32 %v569, %v599
        %v602 = vmul.f32 %v503, %v574
        %v603 = vmul.f32 %v505, %v578
        %v605 = vlaneseq
        %v606 = vshrl.u32 %v605, 7
        %v607 = vsub.s32 0, %v606
        %v608 = vrot.slane %v601, %v607
        %v609 = vlaneseq
        %v610 = vshrl.u32 %v609, 7
        %v611 = vsub.s32 1, %v610
        %v612 = vrot.slane %v601, %v611
        %v615 = vadd.f32 %v602, %v608
        %v616 = vadd.f32 %v603, %v612
        %v617 = vmul.f32 %v615, 0.1
        %v618 = vmul.f32 %v616, 0.1
        %v619 = vmax.f32 %v615, %v617
        %v620 = vmax.f32 %v616, %v618
        %v621 = vld [vmem:[#allocation10] sm:$0xff]
        %v622 = vpack.c.bf16 %v619, %v619
        %v623 = vpack.c.bf16 %v620, %v620
        %v624 = vld [vmem:[%s350] sm:$0xf]
        %v625 = vld [vmem:[%s350 + $0x4] sm:$0xf]
        %v626 = vld [vmem:[%s350 + $0x8] sm:$0xf]
        %v627 = vld [vmem:[%s350 + $0xc] sm:$0xf]
        %v628 = vld [vmem:[%s350 + $0x10] sm:$0xf]
        %v629 = vld [vmem:[%s350 + $0x14] sm:$0xf]
        %v630 = vld [vmem:[%s350 + $0x18] sm:$0xf]
        %v631 = vld [vmem:[%s350 + $0x1c] sm:$0xf]
        %v632 = vld [vmem:[%s350 + $0x20] sm:$0xf]
        %v633 = vld [vmem:[%s350 + $0x24] sm:$0xf]
        %v634 = vld [vmem:[%s350 + $0x28] sm:$0xf]
        %v635 = vld [vmem:[%s350 + $0x2c] sm:$0xf]
        %v636 = vld [vmem:[%s350 + $0x30] sm:$0xf]
        %v637 = vld [vmem:[%s350 + $0x34] sm:$0xf]
        %v638 = vld [vmem:[%s350 + $0x38] sm:$0xf]
        %v639 = vld [vmem:[%s350 + $0x3c] sm:$0xf]
        %v640 = vld [vmem:[%s350 + $0x40] sm:$0xf]
        %v641 = vld [vmem:[%s350 + $0x44] sm:$0xf]
        %v642 = vld [vmem:[%s350 + $0x48] sm:$0xf]
        %v643 = vld [vmem:[%s350 + $0x4c] sm:$0xf]
        %v644 = vld [vmem:[%s350 + $0x50] sm:$0xf]
        %v645 = vld [vmem:[%s350 + $0x54] sm:$0xf]
        %v646 = vld [vmem:[%s350 + $0x58] sm:$0xf]
        %v647 = vld [vmem:[%s350 + $0x5c] sm:$0xf]
        %v648 = vld [vmem:[%s350 + $0x60] sm:$0xf]
        %v649 = vld [vmem:[%s350 + $0x64] sm:$0xf]
        %v650 = vld [vmem:[%s350 + $0x68] sm:$0xf]
        %v651 = vld [vmem:[%s350 + $0x6c] sm:$0xf]
        %v652 = vld [vmem:[%s350 + $0x70] sm:$0xf]
        %v653 = vld [vmem:[%s350 + $0x74] sm:$0xf]
        %v654 = vld [vmem:[%s350 + $0x78] sm:$0xf]
        %v655 = vld [vmem:[%s350 + $0x7c] sm:$0xf]
        %v688 = vunpack.c.l.b16 %v624
        %v689 = vunpack.c.l.b16 %v625
        %v690 = vunpack.c.l.b16 %v626
        %v691 = vunpack.c.l.b16 %v627
        %v692 = vunpack.c.l.b16 %v628
        %v693 = vunpack.c.l.b16 %v629
        %v694 = vunpack.c.l.b16 %v630
        %v695 = vunpack.c.l.b16 %v631
        %v696 = vunpack.c.l.b16 %v632
        %v697 = vunpack.c.l.b16 %v633
        %v698 = vunpack.c.l.b16 %v634
        %v699 = vunpack.c.l.b16 %v635
        %v700 = vunpack.c.l.b16 %v636
        %v701 = vunpack.c.l.b16 %v637
        %v702 = vunpack.c.l.b16 %v638
        %v703 = vunpack.c.l.b16 %v639
        %v704 = vunpack.c.l.b16 %v640
        %v705 = vunpack.c.l.b16 %v641
        %v706 = vunpack.c.l.b16 %v642
        %v707 = vunpack.c.l.b16 %v643
        %v708 = vunpack.c.l.b16 %v644
        %v709 = vunpack.c.l.b16 %v645
        %v710 = vunpack.c.l.b16 %v646
        %v711 = vunpack.c.l.b16 %v647
        %v712 = vunpack.c.l.b16 %v648
        %v713 = vunpack.c.l.b16 %v649
        %v714 = vunpack.c.l.b16 %v650
        %v715 = vunpack.c.l.b16 %v651
        %v716 = vunpack.c.l.b16 %v652
        %v717 = vunpack.c.l.b16 %v653
        %v718 = vunpack.c.l.b16 %v654
        %v719 = vunpack.c.l.b16 %v655
        %v720 = vpack.c.b16 %v689, %v688
        %v721 = vpack.c.b16 %v691, %v690
        %v722 = vpack.c.b16 %v693, %v692
        %v723 = vpack.c.b16 %v695, %v694
        %v724 = vpack.c.b16 %v697, %v696
        %v725 = vpack.c.b16 %v699, %v698
        %v726 = vpack.c.b16 %v701, %v700
        %v727 = vpack.c.b16 %v703, %v702
        %v728 = vpack.c.b16 %v705, %v704
        %v729 = vpack.c.b16 %v707, %v706
        %v730 = vpack.c.b16 %v709, %v708
        %v731 = vpack.c.b16 %v711, %v710
        %v732 = vpack.c.b16 %v713, %v712
        %v733 = vpack.c.b16 %v715, %v714
        %v734 = vpack.c.b16 %v717, %v716
        %v735 = vpack.c.b16 %v719, %v718
        %752 = vmatprep.subr.bf16.mxu0 0
        %753 = vmatpush1.bf16.msra.mxu0 %v727
        %754 = vmatprep.subr.bf16.mxu0 0
        %755 = vmatpush1.bf16.msra.mxu0 %v726
        %756 = vmatprep.subr.bf16.mxu0 0
        %757 = vmatpush1.bf16.msra.mxu0 %v725
        %758 = vmatprep.subr.bf16.mxu0 0
        %759 = vmatpush1.bf16.msra.mxu0 %v724
        %760 = vmatprep.subr.bf16.mxu0 0
        %761 = vmatpush1.bf16.msra.mxu0 %v723
        %762 = vmatprep.subr.bf16.mxu0 0
        %763 = vmatpush1.bf16.msra.mxu0 %v722
        %764 = vmatprep.subr.bf16.mxu0 0
        %765 = vmatpush1.bf16.msra.mxu0 %v721
        %766 = vmatprep.subr.bf16.mxu0 0
        %767 = vmatpush1.bf16.msra.mxu0 %v720
        %768 = vmatprep.subr.bf16.mxu0 0
        %769 = vmatpush2.bf16.msra.mxu0 %v735
        %770 = vmatprep.subr.bf16.mxu0 0
        %771 = vmatpush2.bf16.msra.mxu0 %v734
        %772 = vmatprep.subr.bf16.mxu0 0
        %773 = vmatpush2.bf16.msra.mxu0 %v733
        %774 = vmatprep.subr.bf16.mxu0 0
        %775 = vmatpush2.bf16.msra.mxu0 %v732
        %776 = vmatprep.subr.bf16.mxu0 0
        %777 = vmatpush2.bf16.msra.mxu0 %v731
        %778 = vmatprep.subr.bf16.mxu0 0
        %779 = vmatpush2.bf16.msra.mxu0 %v730
        %780 = vmatprep.subr.bf16.mxu0 0
        %781 = vmatpush2.bf16.msra.mxu0 %v729
        %782 = vmatprep.subr.bf16.mxu0 0
        %783 = vmatpush2.bf16.msra.mxu0 %v728
        %784 = vmatprep.mubr.bf16.mxu0 %v623
        %785 = vmatmul.mubr.bf16.gmra.mxu0 %v622
        %v786 = vpop.f32.mrf.mxu0
        %v787 = vadd.f32 0.0, %v786
        %v788 = vpop.f32.mrf.mxu0
        %v789 = vpop.f32.mrf.mxu0
        %v790 = vpop.f32.mrf.mxu0
        %791 = vdwg.mxu0
        %v792 = vadd.f32 %v621, %v787
        %793 = vst [vmem:[#allocation10] sm:$0xff] %v792
        // Predicated region
        $region65: #{tpu_custom_call.1} parent=43 // pred_check
          %p794 = pneg %p208
        $region66: #{tpu_custom_call.1} parent=43 // pred_check_branch
          %796 = sbr.rel (%p794) target = $region68
        $region67: #{tpu_custom_call.1} parent=43 // pred_region
          %s798 = ssub.s32 128, 128
          %799 = vsyncadd [#allocation4], %s798
          %s800 = smul.addr %s29, 128
          %s801 = scalar_lea.hbm %s6, %s800
          %s803 = sshll.u32 [#allocation10], 4
          %s804 = int_to_ptr.vmem [resolvable:$true] %s803
          %806 = dma.vmem_to_hbm [thread:$0]  %s804, 128, %s801, [#allocation4]
        $region68: #{tpu_custom_call.1} parent=43 // pred_fallthru
          _
        // Predicated region
        $region69: #{tpu_custom_call.1} parent=43 // pred_check
          %p807 = pneg %p208
        $region70: #{tpu_custom_call.1} parent=43 // pred_check_branch
          %809 = sbr.rel (%p807) target = $region72
        $region71: #{tpu_custom_call.1} parent=43 // pred_region
          %810 = dma.done [#allocation4], 128
        $region72: #{tpu_custom_call.1} parent=43 // pred_fallthru
          _
      $region44: #{tpu_custom_call.1} parent=5 // pred_fallthru
        _
      %p811 = scmp.le.s32.totalorder 2, %s20
      // Predicated region
      $region73: #{tpu_custom_call.1} parent=5 // pred_check
        %p812 = pneg %p811
      $region74: #{tpu_custom_call.1} parent=5 // pred_check_branch
        %814 = sbr.rel (%p812) target = $region76
      $region75: #{tpu_custom_call.1} parent=5 // pred_region
        %s815 = ssub.s32 %s20, 2
      $region76: #{tpu_custom_call.1} parent=5 // pred_fallthru
        _
    $region6: #{tpu_custom_call.1} parent=1 // loop_footer
      %s24 = sadd.s32 1, %s20
    $region7: #{tpu_custom_call.1} parent=1 // loop_footer_branch
      %19 = sbr.rel target = $region3
    $region8: #{tpu_custom_call.1} parent=1 // loop_exit
      _
    %816 = vsyncpa [#allocation3], 1
    %s817 = scalar_lea.sflag [#allocation3], 1
    %818 = vsyncpa %s817, 1
    %819 = vsyncpa [#allocation6], 1
    %s820 = scalar_lea.sflag [#allocation6], 1
    %821 = vsyncpa %s820, 1
    %822 = vsyncpa [#allocation9], 1
    %s823 = scalar_lea.sflag [#allocation9], 1
    %824 = vsyncpa %s823, 1
    %825 = vsyncpa [#allocation4], 1
    %s826 = scalar_lea.sflag [#allocation4], 1
    %827 = vsyncpa %s826, 1

</llo_original>
